<compile_context>
chip_gen: v6e
topology: v6e:2x2x1
jax: 0.10.0
libtpu: 0.0.40
codegen_flags: <defaults>
</compile_context>

<pallas_src>
import functools

import jax
import jax.numpy as jnp
from jax.experimental import pallas as pl
from jax.experimental.pallas import tpu as pltpu


HP = 128   # lane-padded hidden/head width: exactly one 128-lane MXU tile (all gens)
GP = 8     # sublane-padded number of graphs: one unmasked [8,128] f32 output tile


# --------------------------------------------------------------------------
# Pallas kernel: entire hot path fused, one independent sample per grid step.
# --------------------------------------------------------------------------
def qnet_kernel(a_ref, p_ref, x_ref, w1_ref, w23_ref, w4_ref, bias_ref, out_ref,
                *, hidden_pad, act_dtype):
    bf16 = jnp.bfloat16
    f32 = jnp.float32

    a = a_ref[...]                       # [N, N]   bf16  normalized adjacency
    p = p_ref[...]                       # [GP, N]  bf16  mean-pool matrix (row-padded)
    x = x_ref[...]                       # [N, Fin] bf16  (batch dim squeezed by spec)

    w2 = w23_ref[:hidden_pad, :]         # [HP, HP] bf16
    w3 = w23_ref[hidden_pad:, :]         # [HP, HP] bf16

    def bias_relu(acc_f32, row):
        # Bias + ReLU in act_dtype (f32 default; bf16 on v6e/v7x keeps VPU in bf16).
        b = bias_ref[row:row + 1, :].astype(act_dtype)
        return jnp.maximum(acc_f32.astype(act_dtype) + b, 0.0)

    # GCNConv 1: relu(A @ X @ W1 + b1), computed as (A @ X) @ W1 since Fin < hidden.
    ax = jnp.dot(a, x, preferred_element_type=f32)                         # [N, Fin]
    h = bias_relu(jnp.dot(ax.astype(bf16), w1_ref[...],
                          preferred_element_type=f32), 0)                  # [N, HP]

    # GCNConv 2: relu(A @ (H @ W2) + b2).
    hw = jnp.dot(h.astype(bf16), w2, preferred_element_type=f32)           # [N, HP]
    h = bias_relu(jnp.dot(a, hw.astype(bf16), preferred_element_type=f32), 1)

    # global_mean_pool: P @ H  -> [GP, HP]
    g = jnp.dot(p, h.astype(bf16), preferred_element_type=f32)

    # MLP head: relu(G @ W3 + b3) @ W4 + b4   (everything lane-padded to HP).
    g = bias_relu(jnp.dot(g.astype(bf16), w3, preferred_element_type=f32), 2)
    out_ref[...] = (jnp.dot(g.astype(bf16), w4_ref[...], preferred_element_type=f32)
                    + bias_ref[3:4, :])


# --------------------------------------------------------------------------
# One-time packing (hoisted out of the per-step path).
# --------------------------------------------------------------------------
def _pad2(m, rows, cols):
    """Zero-pad a 2-D array up to (rows, cols)."""
    return jnp.zeros((rows, cols), m.dtype).at[:m.shape[0], :m.shape[1]].set(m)


def build_gcn_norm_adj(edge_index, num_nodes):
    """Dense D^{-1/2} (A + I) D^{-1/2}, A[dst, src] += 1 per edge (GCNConv norm)."""
    src, dst = edge_index[0], edge_index[1]
    a = jnp.zeros((num_nodes, num_nodes), jnp.float32)
    a = a.at[dst, src].add(1.0)          # .add: duplicate edges accumulate (PyG parity)
    a = a + jnp.eye(num_nodes, dtype=jnp.float32)
    deg = jnp.sum(a, axis=1)
    dinv = jnp.where(deg > 0, 1.0 / jnp.sqrt(deg), 0.0)
    return a * dinv[:, None] * dinv[None, :]


def build_mean_pool(batch, num_graphs, num_nodes):
    onehot = jnp.zeros((num_graphs, num_nodes), jnp.float32)
    onehot = onehot.at[batch, jnp.arange(num_nodes)].set(1.0)
    counts = jnp.maximum(jnp.sum(onehot, axis=1, keepdims=True), 1.0)
    return onehot / counts               # rows sum to 1


def pack_graph(edge_index, batch, num_nodes, num_graphs):
    """Call ONCE per graph structure; result is reused by every forward."""
    a_norm = build_gcn_norm_adj(edge_index, num_nodes)
    pool = build_mean_pool(batch, num_graphs, num_nodes)
    return (a_norm.astype(jnp.bfloat16),                       # [N, N]
            _pad2(pool, GP, num_nodes).astype(jnp.bfloat16))   # [GP, N]


def pack_params(params):
    """Call ONCE per parameter update; result is reused by every forward."""
    w1, b1, w2, b2, w3, b3, w4, b4 = params
    in_features = w1.shape[0]
    bf16 = jnp.bfloat16
    w1p = _pad2(w1, in_features, HP).astype(bf16)                          # [Fin, HP]
    w23 = jnp.concatenate([_pad2(w2, HP, HP), _pad2(w3, HP, HP)],
                          axis=0).astype(bf16)                             # [2*HP, HP]
    w4p = _pad2(w4, HP, HP).astype(bf16)                                   # [HP, HP]
    bias = jnp.concatenate([_pad2(b1, 1, HP), _pad2(b2, 1, HP),
                            _pad2(b3, 1, HP), _pad2(b4, 1, HP)],
                           axis=0).astype(jnp.float32)                     # [4, HP]
    return w1p, w23, w4p, bias


# --------------------------------------------------------------------------
# Hot path: one pallas_call, grid over the batch-of-states axis.
# --------------------------------------------------------------------------
def qnetwork_forward(graph_pack, param_pack, x, *, num_graphs, num_actions,
                     act_dtype=jnp.float32):
    """x: [B, N, Fin] (or [N, Fin]) float -> [B, num_graphs, num_actions] float32."""
    a, p = graph_pack
    w1p, w23, w4p, bias = param_pack

    squeeze = (x.ndim == 2)
    if squeeze:
        x = x[None]
    B, N, Fin = x.shape
    xb = x.astype(jnp.bfloat16)          # the only per-step operand prep

    flops = 2 * B * (N * N * Fin + N * Fin * HP + N * HP * HP + N * N * HP
                     + GP * N * HP + 2 * GP * HP * HP)
    bytes_accessed = (a.nbytes + p.nbytes + xb.nbytes + w1p.nbytes + w23.nbytes
                      + w4p.nbytes + bias.nbytes + B * GP * HP * 4)

    kernel = functools.partial(qnet_kernel, hidden_pad=HP, act_dtype=act_dtype)

    out_full = pl.pallas_call(
        kernel,
        out_shape=jax.ShapeDtypeStruct((B, GP, HP), jnp.float32),
        grid=(B,),
        in_specs=[
            pl.BlockSpec((N, N), lambda b: (0, 0)),             # A_norm   (shared)
            pl.BlockSpec((GP, N), lambda b: (0, 0)),            # pool P   (shared)
            pl.BlockSpec((None, N, Fin), lambda b: (b, 0, 0)),  # X        (per sample)
            pl.BlockSpec((Fin, HP), lambda b: (0, 0)),          # W1       (shared)
            pl.BlockSpec((2 * HP, HP), lambda b: (0, 0)),       # W2 | W3  (shared)
            pl.BlockSpec((HP, HP), lambda b: (0, 0)),           # W4       (shared)
            pl.BlockSpec((4, HP), lambda b: (0, 0)),            # biases   (shared)
        ],
        out_specs=pl.BlockSpec((None, GP, HP), lambda b: (b, 0, 0)),
        compiler_params=pltpu.CompilerParams(
            dimension_semantics=("parallel",)),                 # megacore on v7x
        cost_estimate=pl.CostEstimate(flops=flops, transcendentals=0,
                                      bytes_accessed=bytes_accessed),
    )(a, p, xb, w1p, w23, w4p, bias)

    out = out_full[:, :num_graphs, :num_actions]
    return out[0] if squeeze else out


# --------------------------------------------------------------------------
# References (for correctness check of the kernel).
# --------------------------------------------------------------------------
def qnetwork_ref_f32(a_norm, pool_mat, x, params):
    w1, b1, w2, b2, w3, b3, w4, b4 = params
    h = jnp.maximum(a_norm @ (x @ w1) + b1, 0.0)
    h = jnp.maximum(a_norm @ (h @ w2) + b2, 0.0)
    g = pool_mat @ h
    g = jnp.maximum(g @ w3 + b3, 0.0)
    return g @ w4 + b4


def qnetwork_ref_bf16(a_norm, pool_mat, x, params):
    """Mirrors the kernel's exact cast / ordering choices (bf16 MXU, f32 acc/VPU)."""
    w1, b1, w2, b2, w3, b3, w4, b4 = params
    bf, f32 = jnp.bfloat16, jnp.float32
    a = a_norm.astype(bf)
    p = pool_mat.astype(bf)
    ax = jnp.dot(a, x.astype(bf), preferred_element_type=f32)
    h = jnp.dot(ax.astype(bf), w1.astype(bf), preferred_element_type=f32) + b1
    h = jnp.maximum(h, 0.0)
    hw = jnp.dot(h.astype(bf), w2.astype(bf), preferred_element_type=f32)
    h = jnp.dot(a, hw.astype(bf), preferred_element_type=f32) + b2
    h = jnp.maximum(h, 0.0)
    g = jnp.dot(p, h.astype(bf), preferred_element_type=f32)
    g = jnp.dot(g.astype(bf), w3.astype(bf), preferred_element_type=f32) + b3
    g = jnp.maximum(g, 0.0)
    return jnp.dot(g.astype(bf), w4.astype(bf), preferred_element_type=f32) + b4


# --------------------------------------------------------------------------
if __name__ == "__main__":
    # Small, deterministic problem: 2 graphs x 8 nodes each, 4 independent states.
    num_nodes = 16
    num_graphs = 2
    in_features = 8
    hidden_features = 32
    num_actions = 4
    batch_size = 4           # independent input states sharing the graph topology

    key = jax.random.PRNGKey(0)
    kx, k1, k2, k3, k4 = jax.random.split(key, 5)

    x = jax.random.normal(kx, (batch_size, num_nodes, in_features), jnp.float32)

    # Deterministic edge_index: a ring inside each graph (both directions).
    edges = []
    for g in range(num_graphs):
        n = num_nodes // num_graphs
        base = g * n
        for i in range(n):
            a_node = base + i
            b_node = base + (i + 1) % n
            edges.append((a_node, b_node))
            edges.append((b_node, a_node))
    edge_index = jnp.array(edges, jnp.int32).T          # [2, E]

    batch = jnp.concatenate([jnp.zeros(8, jnp.int32), jnp.ones(8, jnp.int32)])

    # Deterministic synthetic parameters (shapes from __init__; not a checkpoint).
    def lin_init(k, fan_in, fan_out):
        kw, kb = jax.random.split(k)
        s = 1.0 / jnp.sqrt(fan_in)
        w = jax.random.uniform(kw, (fan_in, fan_out), jnp.float32, -s, s)
        b = jax.random.uniform(kb, (1, fan_out), jnp.float32, -s, s)
        return w, b

    w1, b1 = lin_init(k1, in_features, hidden_features)       # conv1
    w2, b2 = lin_init(k2, hidden_features, hidden_features)   # conv2
    w3, b3 = lin_init(k3, hidden_features, hidden_features)   # lin1
    w4, b4 = lin_init(k4, hidden_features, num_actions)       # lin2
    params = (w1, b1, w2, b2, w3, b3, w4, b4)

    # One-time packing (graph structure + weights), reused across every step.
    graph_pack = pack_graph(edge_index, batch, num_nodes, num_graphs)
    param_pack = pack_params(params)

    fwd = jax.jit(functools.partial(qnetwork_forward,
                                    num_graphs=num_graphs, num_actions=num_actions))
    out = fwd(graph_pack, param_pack, x)
    jax.block_until_ready(out)
    assert out.shape == (batch_size, num_graphs, num_actions)

    # Tight check vs a reference that emulates the kernel's bf16/f32 mix ...
    a_norm = build_gcn_norm_adj(edge_index, num_nodes)
    pool_mat = build_mean_pool(batch, num_graphs, num_nodes)
    ref_bf16 = jax.vmap(lambda xi: qnetwork_ref_bf16(a_norm, pool_mat, xi, params))(x)
    assert jnp.allclose(out, ref_bf16, atol=2e-2, rtol=2e-2)
    # ... and a looser sanity check vs the full-f32 module semantics.
    ref_f32 = jax.vmap(lambda xi: qnetwork_ref_f32(a_norm, pool_mat, xi, params))(x)
    assert jnp.allclose(out, ref_f32, atol=1e-1, rtol=1e-1)

    print("KERNEL_OK")
</pallas_src>

<mosaic_0001>
module attributes {stable_mosaic.version = 11 : i64} {
  func.func @qnet_kernel(%arg0: i32, %arg1: memref<16x16xbf16, #tpu.memory_space<vmem>>, %arg2: memref<8x16xbf16, #tpu.memory_space<vmem>>, %arg3: memref<1x16x8xbf16, #tpu.memory_space<vmem>>, %arg4: memref<8x128xbf16, #tpu.memory_space<vmem>>, %arg5: memref<256x128xbf16, #tpu.memory_space<vmem>>, %arg6: memref<128x128xbf16, #tpu.memory_space<vmem>>, %arg7: memref<4x128xf32, #tpu.memory_space<vmem>>, %arg8: memref<1x8x128xf32, #tpu.memory_space<vmem>>) attributes {dimension_semantics = [#tpu.dimension_semantics<parallel>], iteration_bounds = array<i64: 4>, scalar_prefetch = 0 : i64, scratch_operands = 0 : i64, tpu.core_type = #tpu.core_type<tc>, window_params = [{pipeline_mode = #tpu.pipeline_mode<synchronous>, transform_indices = @transform_0, window_bounds = array<i64: 16, 16>}, {pipeline_mode = #tpu.pipeline_mode<synchronous>, transform_indices = @transform_1, window_bounds = array<i64: 8, 16>}, {transform_indices = @transform_2, window_bounds = array<i64: 1, 16, 8>}, {pipeline_mode = #tpu.pipeline_mode<synchronous>, transform_indices = @transform_3, window_bounds = array<i64: 8, 128>}, {pipeline_mode = #tpu.pipeline_mode<synchronous>, transform_indices = @transform_4, window_bounds = array<i64: 256, 128>}, {pipeline_mode = #tpu.pipeline_mode<synchronous>, transform_indices = @transform_5, window_bounds = array<i64: 128, 128>}, {pipeline_mode = #tpu.pipeline_mode<synchronous>, transform_indices = @transform_6, window_bounds = array<i64: 4, 128>}, {transform_indices = @transform_7, window_bounds = array<i64: 1, 8, 128>}]} {
    %c0 = arith.constant 0 : index
    %c0_0 = arith.constant 0 : index
    %0 = vector.load %arg1[%c0, %c0_0] : memref<16x16xbf16, #tpu.memory_space<vmem>>, vector<16x16xbf16>
    %c0_1 = arith.constant 0 : index
    %c0_2 = arith.constant 0 : index
    %1 = vector.load %arg2[%c0_1, %c0_2] : memref<8x16xbf16, #tpu.memory_space<vmem>>, vector<8x16xbf16>
    %c0_3 = arith.constant 0 : index
    %c0_4 = arith.constant 0 : index
    %c0_5 = arith.constant 0 : index
    %2 = vector.load %arg3[%c0_3, %c0_4, %c0_5] : memref<1x16x8xbf16, #tpu.memory_space<vmem>>, vector<1x16x8xbf16>
    %3 = vector.shape_cast %2 : vector<1x16x8xbf16> to vector<16x8xbf16>
    %c0_6 = arith.constant 0 : index
    %c0_7 = arith.constant 0 : index
    %4 = vector.load %arg5[%c0_6, %c0_7] : memref<256x128xbf16, #tpu.memory_space<vmem>>, vector<128x128xbf16>
    %c128 = arith.constant 128 : index
    %c0_8 = arith.constant 0 : index
    %5 = vector.load %arg5[%c128, %c0_8] : memref<256x128xbf16, #tpu.memory_space<vmem>>, vector<128x128xbf16>
    %cst = arith.constant dense<0.000000e+00> : vector<16x8xf32>
    %6 = tpu.matmul %0, %3, %cst {dimension_numbers = #tpu.dot_dimension_numbers<[1], [0], [0], [1], [0, 0, 1, 1], [], []>} : vector<16x16xbf16>, vector<16x8xbf16>, vector<16x8xf32> -> vector<16x8xf32>
    %7 = arith.truncf %6 : vector<16x8xf32> to vector<16x8xbf16>
    %c0_9 = arith.constant 0 : index
    %c0_10 = arith.constant 0 : index
    %8 = vector.load %arg4[%c0_9, %c0_10] : memref<8x128xbf16, #tpu.memory_space<vmem>>, vector<8x128xbf16>
    %cst_11 = arith.constant dense<0.000000e+00> : vector<16x128xf32>
    %9 = tpu.matmul %7, %8, %cst_11 {dimension_numbers = #tpu.dot_dimension_numbers<[1], [0], [0], [1], [0, 0, 1, 1], [], []>} : vector<16x8xbf16>, vector<8x128xbf16>, vector<16x128xf32> -> vector<16x128xf32>
    %c0_12 = arith.constant 0 : index
    %c0_13 = arith.constant 0 : index
    %10 = vector.load %arg7[%c0_12, %c0_13] : memref<4x128xf32, #tpu.memory_space<vmem>>, vector<1x128xf32>
    %11 = vector.broadcast %10 : vector<1x128xf32> to vector<16x128xf32>
    %12 = arith.addf %9, %11 : vector<16x128xf32>
    %cst_14 = arith.constant 0.000000e+00 : f32
    %13 = vector.broadcast %cst_14 : f32 to vector<16x128xf32>
    %14 = arith.maximumf %12, %13 : vector<16x128xf32>
    %15 = arith.truncf %14 : vector<16x128xf32> to vector<16x128xbf16>
    %cst_15 = arith.constant dense<0.000000e+00> : vector<16x128xf32>
    %16 = tpu.matmul %15, %4, %cst_15 {dimension_numbers = #tpu.dot_dimension_numbers<[1], [0], [0], [1], [0, 0, 1, 1], [], []>} : vector<16x128xbf16>, vector<128x128xbf16>, vector<16x128xf32> -> vector<16x128xf32>
    %17 = arith.truncf %16 : vector<16x128xf32> to vector<16x128xbf16>
    %cst_16 = arith.constant dense<0.000000e+00> : vector<16x128xf32>
    %18 = tpu.matmul %0, %17, %cst_16 {dimension_numbers = #tpu.dot_dimension_numbers<[1], [0], [0], [1], [0, 0, 1, 1], [], []>} : vector<16x16xbf16>, vector<16x128xbf16>, vector<16x128xf32> -> vector<16x128xf32>
    %c1 = arith.constant 1 : index
    %c0_17 = arith.constant 0 : index
    %19 = vector.load %arg7[%c1, %c0_17] : memref<4x128xf32, #tpu.memory_space<vmem>>, vector<1x128xf32>
    %20 = vector.broadcast %19 : vector<1x128xf32> to vector<16x128xf32>
    %21 = arith.addf %18, %20 : vector<16x128xf32>
    %cst_18 = arith.constant 0.000000e+00 : f32
    %22 = vector.broadcast %cst_18 : f32 to vector<16x128xf32>
    %23 = arith.maximumf %21, %22 : vector<16x128xf32>
    %24 = arith.truncf %23 : vector<16x128xf32> to vector<16x128xbf16>
    %cst_19 = arith.constant dense<0.000000e+00> : vector<8x128xf32>
    %25 = tpu.matmul %1, %24, %cst_19 {dimension_numbers = #tpu.dot_dimension_numbers<[1], [0], [0], [1], [0, 0, 1, 1], [], []>} : vector<8x16xbf16>, vector<16x128xbf16>, vector<8x128xf32> -> vector<8x128xf32>
    %26 = arith.truncf %25 : vector<8x128xf32> to vector<8x128xbf16>
    %cst_20 = arith.constant dense<0.000000e+00> : vector<8x128xf32>
    %27 = tpu.matmul %26, %5, %cst_20 {dimension_numbers = #tpu.dot_dimension_numbers<[1], [0], [0], [1], [0, 0, 1, 1], [], []>} : vector<8x128xbf16>, vector<128x128xbf16>, vector<8x128xf32> -> vector<8x128xf32>
    %c2 = arith.constant 2 : index
    %c0_21 = arith.constant 0 : index
    %28 = vector.load %arg7[%c2, %c0_21] : memref<4x128xf32, #tpu.memory_space<vmem>>, vector<1x128xf32>
    %29 = vector.broadcast %28 : vector<1x128xf32> to vector<8x128xf32>
    %30 = arith.addf %27, %29 : vector<8x128xf32>
    %cst_22 = arith.constant 0.000000e+00 : f32
    %31 = vector.broadcast %cst_22 : f32 to vector<8x128xf32>
    %32 = arith.maximumf %30, %31 : vector<8x128xf32>
    %33 = arith.truncf %32 : vector<8x128xf32> to vector<8x128xbf16>
    %c0_23 = arith.constant 0 : index
    %c0_24 = arith.constant 0 : index
    %34 = vector.load %arg6[%c0_23, %c0_24] : memref<128x128xbf16, #tpu.memory_space<vmem>>, vector<128x128xbf16>
    %cst_25 = arith.constant dense<0.000000e+00> : vector<8x128xf32>
    %35 = tpu.matmul %33, %34, %cst_25 {dimension_numbers = #tpu.dot_dimension_numbers<[1], [0], [0], [1], [0, 0, 1, 1], [], []>} : vector<8x128xbf16>, vector<128x128xbf16>, vector<8x128xf32> -> vector<8x128xf32>
    %c3 = arith.constant 3 : index
    %c0_26 = arith.constant 0 : index
    %36 = vector.load %arg7[%c3, %c0_26] : memref<4x128xf32, #tpu.memory_space<vmem>>, vector<1x128xf32>
    %37 = vector.broadcast %36 : vector<1x128xf32> to vector<8x128xf32>
    %38 = arith.addf %35, %37 : vector<8x128xf32>
    %c0_27 = arith.constant 0 : index
    %c0_28 = arith.constant 0 : index
    %c0_29 = arith.constant 0 : index
    %39 = vector.load %arg8[%c0_27, %c0_28, %c0_29] : memref<1x8x128xf32, #tpu.memory_space<vmem>>, vector<1x8x128xf32>
    %40 = vector.shape_cast %39 : vector<1x8x128xf32> to vector<8x128xf32>
    %41 = vector.shape_cast %38 : vector<8x128xf32> to vector<1x8x128xf32>
    tpu.vector_store %arg8[%c0_27, %c0_28, %c0_29], %41 {strides = array<i32>} : memref<1x8x128xf32, #tpu.memory_space<vmem>>, vector<1x8x128xf32>,
    return
  }
  func.func @transform_0(%arg0: i32) -> (i32, i32) {
    %c0_i32 = arith.constant 0 : i32
    %c0_i32_0 = arith.constant 0 : i32
    %c0_i32_1 = arith.constant 0 : i32
    return %c0_i32, %c0_i32_0 : i32, i32
  }
  func.func @transform_1(%arg0: i32) -> (i32, i32) {
    %c0_i32 = arith.constant 0 : i32
    %c0_i32_0 = arith.constant 0 : i32
    %c0_i32_1 = arith.constant 0 : i32
    return %c0_i32, %c0_i32_0 : i32, i32
  }
  func.func @transform_2(%arg0: i32) -> (i32, i32, i32) {
    %c0_i32 = arith.constant 0 : i32
    %c0_i32_0 = arith.constant 0 : i32
    %c0_i32_1 = arith.constant 0 : i32
    return %arg0, %c0_i32, %c0_i32_0 : i32, i32, i32
  }
  func.func @transform_3(%arg0: i32) -> (i32, i32) {
    %c0_i32 = arith.constant 0 : i32
    %c0_i32_0 = arith.constant 0 : i32
    %c0_i32_1 = arith.constant 0 : i32
    return %c0_i32, %c0_i32_0 : i32, i32
  }
  func.func @transform_4(%arg0: i32) -> (i32, i32) {
    %c0_i32 = arith.constant 0 : i32
    %c0_i32_0 = arith.constant 0 : i32
    %c0_i32_1 = arith.constant 0 : i32
    return %c0_i32, %c0_i32_0 : i32, i32
  }
  func.func @transform_5(%arg0: i32) -> (i32, i32) {
    %c0_i32 = arith.constant 0 : i32
    %c0_i32_0 = arith.constant 0 : i32
    %c0_i32_1 = arith.constant 0 : i32
    return %c0_i32, %c0_i32_0 : i32, i32
  }
  func.func @transform_6(%arg0: i32) -> (i32, i32) {
    %c0_i32 = arith.constant 0 : i32
    %c0_i32_0 = arith.constant 0 : i32
    %c0_i32_1 = arith.constant 0 : i32
    return %c0_i32, %c0_i32_0 : i32, i32
  }
  func.func @transform_7(%arg0: i32) -> (i32, i32, i32) {
    %c0_i32 = arith.constant 0 : i32
    %c0_i32_0 = arith.constant 0 : i32
    %c0_i32_1 = arith.constant 0 : i32
    return %arg0, %c0_i32, %c0_i32_0 : i32, i32, i32
  }
}

</mosaic_0001>

<llo_original>
// kernel: qnetwork_forward.1
$region0: #{qnetwork_forward.1}
  #allocation0 [shape = 'u32[]', space=smem, size = 0x4, offset = 0x4, fixed_abs, tag = 'smem constant byte address 0x4 - core index']
  #allocation1 [shape = 'u32[144,128]{1,0:T(1,128)}', space=vmem, size = 0x12000, scoped, tag = 'internal scratch']
  %s0 = inlined_call_operand.vmem [shape: bf16[16,16], index: 0, kind: input, shape index: {}]
  %s1 = inlined_call_operand.vmem [shape: bf16[8,16], index: 1, kind: input, shape index: {}]
  %s2 = inlined_call_operand.vmem [shape: bf16[4,16,8], index: 2, kind: input, shape index: {}]
  %s3 = inlined_call_operand.vmem [shape: bf16[8,128], index: 3, kind: input, shape index: {}]
  %s4 = inlined_call_operand.hbm [shape: bf16[256,128], index: 4, kind: input, shape index: {}]
  %s5 = inlined_call_operand.vmem [shape: bf16[128,128], index: 5, kind: input, shape index: {}]
  %s6 = inlined_call_operand.vmem [shape: f32[4,128], index: 6, kind: input, shape index: {}]
  %s7 = inlined_call_operand.vmem [shape: f32[4,8,128], index: 7, kind: output, shape index: {}]
  %s8 = sld [smem:[#allocation0]]
  $region65: #{qnetwork_forward.1} parent=0
    _
  %s10 = ssub.s32 1, %s8
  %s11 = scalar_select 0, %s10, %s8
  $region1: #{qnetwork_forward.1} parent=0
    #allocation2 [shape = 'u8[65536]{0}', space=vmem, size = 0x10000, scoped, tag = 'input window, operand 4, single buffered']
    #allocation3 [shape = 's32[2]{0}', space=sflag, size = 0x8, scoped, tag = 'scoped memory for qnetwork_forward.1']
    %12 = vsyncpa [#allocation3], 0
    loop: start=0, step=1, limit=6
    $region2: #{qnetwork_forward.1} parent=1 // loop_pre_header
      _
    $region3: #{qnetwork_forward.1} parent=1 // loop_header
      %s14 = sphi 0, %s18
      %p15 = scmp.ge.s32.totalorder %s14, 6
      %s22 = sphi 0, %s22
      %s24 = sphi 0, %s22
      %s25 = sphi 0, %s24
      %s39 = sphi 0, %s25
      %s43 = sphi 0, %s43
      %s45 = sphi 0, %s43
      %s46 = sphi 0, %s45
      %s60 = sphi 0, %s46
      %s66 = sphi 0, %s68
      %s69 = sphi 0, %s66
      %s70 = sphi 0, %s69
      %s86 = sphi 0, %s70
      %s90 = sphi 0, %s90
      %s92 = sphi 0, %s90
      %s93 = sphi 0, %s92
      %s107 = sphi 0, %s93
      %s111 = sphi 0, %s111
      %s113 = sphi 0, %s111
      %s114 = sphi 0, %s113
      %s128 = sphi 0, %s114
      %s132 = sphi 0, %s132
      %s134 = sphi 0, %s132
      %s135 = sphi 0, %s134
      %s149 = sphi 0, %s135
      %s153 = sphi 0, %s153
      %s155 = sphi 0, %s153
      %s156 = sphi 0, %s155
      %s170 = sphi 0, %s156
      %s176 = sphi 0, %s178
      %s179 = sphi 0, %s176
      %s180 = sphi 0, %s179
      %s196 = sphi 0, %s180
    $region4: #{qnetwork_forward.1} parent=1 // loop_header_branch
      %17 = sbr.rel (%p15) target = $region8
    $region5: #{qnetwork_forward.1} parent=1 // loop_body
      %s19 = ssub.s32 %s14, 1
      %s20 = ssub.s32 %s14, 2
      %s21 = sadd.s32 %s14, 1
      %s23 = sadd.s32 %s22, 1
      %p26 = scmp.eq.s32.totalorder %s14, 3
      %p27 = scmp.ne.s32.totalorder %s22, %s24
      %p28 = scmp.eq.s32.totalorder %s14, 0
      %p29 = por %p27, %p28
      %p30 = scmp.ne.s32.totalorder %s22, %s24
      %p31 = scmp.eq.s32.totalorder %s19, 3
      %p32 = por %p30, %p31
      %p33 = scmp.ne.s32.totalorder %s24, %s25
      %p34 = scmp.eq.s32.totalorder %s19, 0
      %p35 = por %p33, %p34
      %p36 = scmp.ne.s32.totalorder %s24, %s25
      %p37 = scmp.eq.s32.totalorder %s20, 3
      %p38 = por %p36, %p37
      %p40 = scmp.ne.s32.totalorder %s25, %s39
      %p41 = scmp.eq.s32.totalorder %s20, 0
      %p42 = por %p40, %p41
      %s44 = sadd.s32 %s43, 1
      %p47 = scmp.eq.s32.totalorder %s14, 3
      %p48 = scmp.ne.s32.totalorder %s43, %s45
      %p49 = scmp.eq.s32.totalorder %s14, 0
      %p50 = por %p48, %p49
      %p51 = scmp.ne.s32.totalorder %s43, %s45
      %p52 = scmp.eq.s32.totalorder %s19, 3
      %p53 = por %p51, %p52
      %p54 = scmp.ne.s32.totalorder %s45, %s46
      %p55 = scmp.eq.s32.totalorder %s19, 0
      %p56 = por %p54, %p55
      %p57 = scmp.ne.s32.totalorder %s45, %s46
      %p58 = scmp.eq.s32.totalorder %s20, 3
      %p59 = por %p57, %p58
      %p61 = scmp.ne.s32.totalorder %s46, %s60
      %p62 = scmp.eq.s32.totalorder %s20, 0
      %p63 = por %p61, %p62
      %s64 = ssub.s32 %s14, %s21
      %p65 = scmp.eq.s32.totalorder %s64, 0
      %s67 = sadd.s32 %s66, 1
      %s68 = scalar_select %p65, %s66, %s67
      %p71 = pneg %p65
      %p72 = scmp.eq.s32.totalorder %s14, 3
      %p73 = por %p71, %p72
      %p74 = scmp.ne.s32.totalorder %s66, %s69
      %p75 = scmp.eq.s32.totalorder %s14, 0
      %p76 = por %p74, %p75
      %p77 = scmp.ne.s32.totalorder %s66, %s69
      %p78 = scmp.eq.s32.totalorder %s19, 3
      %p79 = por %p77, %p78
      %p80 = scmp.ne.s32.totalorder %s69, %s70
      %p81 = scmp.eq.s32.totalorder %s19, 0
      %p82 = por %p80, %p81
      %p83 = scmp.ne.s32.totalorder %s69, %s70
      %p84 = scmp.eq.s32.totalorder %s20, 3
      %p85 = por %p83, %p84
      %p87 = scmp.ne.s32.totalorder %s70, %s86
      %p88 = scmp.eq.s32.totalorder %s20, 0
      %p89 = por %p87, %p88
      %s91 = sadd.s32 %s90, 1
      %p94 = scmp.eq.s32.totalorder %s14, 3
      %p95 = scmp.ne.s32.totalorder %s90, %s92
      %p96 = scmp.eq.s32.totalorder %s14, 0
      %p97 = por %p95, %p96
      %p98 = scmp.ne.s32.totalorder %s90, %s92
      %p99 = scmp.eq.s32.totalorder %s19, 3
      %p100 = por %p98, %p99
      %p101 = scmp.ne.s32.totalorder %s92, %s93
      %p102 = scmp.eq.s32.totalorder %s19, 0
      %p103 = por %p101, %p102
      %p104 = scmp.ne.s32.totalorder %s92, %s93
      %p105 = scmp.eq.s32.totalorder %s20, 3
      %p106 = por %p104, %p105
      %p108 = scmp.ne.s32.totalorder %s93, %s107
      %p109 = scmp.eq.s32.totalorder %s20, 0
      %p110 = por %p108, %p109
      %s112 = sadd.s32 %s111, 1
      %p115 = scmp.eq.s32.totalorder %s14, 3
      %p116 = scmp.ne.s32.totalorder %s111, %s113
      %p117 = scmp.eq.s32.totalorder %s14, 0
      %p118 = por %p116, %p117
      %p119 = scmp.ne.s32.totalorder %s111, %s113
      %p120 = scmp.eq.s32.totalorder %s19, 3
      %p121 = por %p119, %p120
      %p122 = scmp.ne.s32.totalorder %s113, %s114
      %p123 = scmp.eq.s32.totalorder %s19, 0
      %p124 = por %p122, %p123
      %p125 = scmp.ne.s32.totalorder %s113, %s114
      %p126 = scmp.eq.s32.totalorder %s20, 3
      %p127 = por %p125, %p126
      %p129 = scmp.ne.s32.totalorder %s114, %s128
      %p130 = scmp.eq.s32.totalorder %s20, 0
      %p131 = por %p129, %p130
      %s133 = sadd.s32 %s132, 1
      %p136 = scmp.eq.s32.totalorder %s14, 3
      %p137 = scmp.ne.s32.totalorder %s132, %s134
      %p138 = scmp.eq.s32.totalorder %s14, 0
      %p139 = por %p137, %p138
      %p140 = scmp.ne.s32.totalorder %s132, %s134
      %p141 = scmp.eq.s32.totalorder %s19, 3
      %p142 = por %p140, %p141
      %p143 = scmp.ne.s32.totalorder %s134, %s135
      %p144 = scmp.eq.s32.totalorder %s19, 0
      %p145 = por %p143, %p144
      %p146 = scmp.ne.s32.totalorder %s134, %s135
      %p147 = scmp.eq.s32.totalorder %s20, 3
      %p148 = por %p146, %p147
      %p150 = scmp.ne.s32.totalorder %s135, %s149
      %p151 = scmp.eq.s32.totalorder %s20, 0
      %p152 = por %p150, %p151
      %s154 = sadd.s32 %s153, 1
      %p157 = scmp.eq.s32.totalorder %s14, 3
      %p158 = scmp.ne.s32.totalorder %s153, %s155
      %p159 = scmp.eq.s32.totalorder %s14, 0
      %p160 = por %p158, %p159
      %p161 = scmp.ne.s32.totalorder %s153, %s155
      %p162 = scmp.eq.s32.totalorder %s19, 3
      %p163 = por %p161, %p162
      %p164 = scmp.ne.s32.totalorder %s155, %s156
      %p165 = scmp.eq.s32.totalorder %s19, 0
      %p166 = por %p164, %p165
      %p167 = scmp.ne.s32.totalorder %s155, %s156
      %p168 = scmp.eq.s32.totalorder %s20, 3
      %p169 = por %p167, %p168
      %p171 = scmp.ne.s32.totalorder %s156, %s170
      %p172 = scmp.eq.s32.totalorder %s20, 0
      %p173 = por %p171, %p172
      %s174 = ssub.s32 %s14, %s21
      %p175 = scmp.eq.s32.totalorder %s174, 0
      %s177 = sadd.s32 %s176, 1
      %s178 = scalar_select %p175, %s176, %s177
      %p181 = pneg %p175
      %p182 = scmp.eq.s32.totalorder %s14, 3
      %p183 = por %p181, %p182
      %p184 = scmp.ne.s32.totalorder %s176, %s179
      %p185 = scmp.eq.s32.totalorder %s14, 0
      %p186 = por %p184, %p185
      %p187 = scmp.ne.s32.totalorder %s176, %s179
      %p188 = scmp.eq.s32.totalorder %s19, 3
      %p189 = por %p187, %p188
      %p190 = scmp.ne.s32.totalorder %s179, %s180
      %p191 = scmp.eq.s32.totalorder %s19, 0
      %p192 = por %p190, %p191
      %p193 = scmp.ne.s32.totalorder %s179, %s180
      %p194 = scmp.eq.s32.totalorder %s20, 3
      %p195 = por %p193, %p194
      %p197 = scmp.ne.s32.totalorder %s180, %s196
      %p198 = scmp.eq.s32.totalorder %s20, 0
      %p199 = por %p197, %p198
      %p200 = scmp.le.s32.totalorder 1, %s14
      %p201 = scmp.lt.s32.totalorder %s14, 5
      %p202 = pnand %p200, %p201
      %p203 = pneg %p202
      // Predicated region
      $region9: #{qnetwork_forward.1} parent=5 // pred_check
        _
      $region10: #{qnetwork_forward.1} parent=5 // pred_check_branch
        %205 = sbr.rel (%p202) target = $region12
      $region11: #{qnetwork_forward.1} parent=5 // pred_region
        %s206 = ssub.s32 %s14, 1
        // Predicated region
        $region13: #{qnetwork_forward.1} parent=11 // pred_check
          %p207 = pneg %p35
        $region14: #{qnetwork_forward.1} parent=11 // pred_check_branch
          %209 = sbr.rel (%p207) target = $region16
        $region15: #{qnetwork_forward.1} parent=11 // pred_region
          _
        $region16: #{qnetwork_forward.1} parent=11 // pred_fallthru
          _
        // Predicated region
        $region17: #{qnetwork_forward.1} parent=11 // pred_check
          %p210 = pneg %p56
        $region18: #{qnetwork_forward.1} parent=11 // pred_check_branch
          %212 = sbr.rel (%p210) target = $region20
        $region19: #{qnetwork_forward.1} parent=11 // pred_region
          _
        $region20: #{qnetwork_forward.1} parent=11 // pred_fallthru
          _
        // Predicated region
        $region21: #{qnetwork_forward.1} parent=11 // pred_check
          %p213 = pneg %p103
        $region22: #{qnetwork_forward.1} parent=11 // pred_check_branch
          %215 = sbr.rel (%p213) target = $region24
        $region23: #{qnetwork_forward.1} parent=11 // pred_region
          _
        $region24: #{qnetwork_forward.1} parent=11 // pred_fallthru
          _
        // Predicated region
        $region25: #{qnetwork_forward.1} parent=11 // pred_check
          %p216 = pneg %p124
        $region26: #{qnetwork_forward.1} parent=11 // pred_check_branch
          %218 = sbr.rel (%p216) target = $region28
        $region27: #{qnetwork_forward.1} parent=11 // pred_region
          %s220 = ssub.s32 2048, 2048
          %221 = vsyncadd [#allocation3], %s220
          %s222 = sshll.u32 [#allocation2], 4
          %s223 = int_to_ptr.vmem [resolvable:$true] %s222
          %228 = dma.hbm_to_vmem [thread:$0]  %s4, 2048, %s223, [#allocation3], 64, 64, 4
        $region28: #{qnetwork_forward.1} parent=11 // pred_fallthru
          _
        // Predicated region
        $region29: #{qnetwork_forward.1} parent=11 // pred_check
          %p229 = pneg %p145
        $region30: #{qnetwork_forward.1} parent=11 // pred_check_branch
          %231 = sbr.rel (%p229) target = $region32
        $region31: #{qnetwork_forward.1} parent=11 // pred_region
          _
        $region32: #{qnetwork_forward.1} parent=11 // pred_fallthru
          _
        // Predicated region
        $region33: #{qnetwork_forward.1} parent=11 // pred_check
          %p232 = pneg %p166
        $region34: #{qnetwork_forward.1} parent=11 // pred_check_branch
          %234 = sbr.rel (%p232) target = $region36
        $region35: #{qnetwork_forward.1} parent=11 // pred_region
          _
        $region36: #{qnetwork_forward.1} parent=11 // pred_fallthru
          _
      $region12: #{qnetwork_forward.1} parent=5 // pred_fallthru
        _
      %p235 = scmp.lt.s32.totalorder %s14, 4
      // Predicated region
      $region37: #{qnetwork_forward.1} parent=5 // pred_check
        %p236 = pneg %p235
      $region38: #{qnetwork_forward.1} parent=5 // pred_check_branch
        %238 = sbr.rel (%p236) target = $region40
      $region39: #{qnetwork_forward.1} parent=5 // pred_region
        // Predicated region
        $region41: #{qnetwork_forward.1} parent=39 // pred_check
          %p239 = pneg %p76
        $region42: #{qnetwork_forward.1} parent=39 // pred_check_branch
          %241 = sbr.rel (%p239) target = $region44
        $region43: #{qnetwork_forward.1} parent=39 // pred_region
          %p242 = scmp.lt.s32.totalorder %s14, 3
          %s243 = scalar_select %p242, %s14, 3
          %s244 = smul.addr %s243, 2
          %s245 = smul.addr %s244, 4
          %s246 = scalar_lea.vmem %s2, %s245
        $region44: #{qnetwork_forward.1} parent=39 // pred_fallthru
          _
      $region40: #{qnetwork_forward.1} parent=5 // pred_fallthru
        _
      %p247 = scmp.le.s32.totalorder 1, %s14
      %p248 = scmp.lt.s32.totalorder %s14, 5
      %p249 = pnand %p247, %p248
      %p250 = pneg %p249
      // Predicated region
      $region45: #{qnetwork_forward.1} parent=5 // pred_check
        _
      $region46: #{qnetwork_forward.1} parent=5 // pred_check_branch
        %252 = sbr.rel (%p249) target = $region48
      $region47: #{qnetwork_forward.1} parent=5 // pred_region
        %s253 = ssub.s32 %s14, 1
        // Predicated region
        $region49: #{qnetwork_forward.1} parent=47 // pred_check
          %p254 = pneg %p124
        $region50: #{qnetwork_forward.1} parent=47 // pred_check_branch
          %256 = sbr.rel (%p254) target = $region52
        $region51: #{qnetwork_forward.1} parent=47 // pred_region
          %257 = dma.done [#allocation3], 2048
        $region52: #{qnetwork_forward.1} parent=47 // pred_fallthru
          _
        %p258 = pneg %p35
        %p259 = pneg %p32
        %p260 = pneg %p56
        %p261 = pneg %p53
        %p262 = scmp.lt.s32.totalorder %s19, 3
        %s263 = scalar_select %p262, %s19, 3
        %s264 = smul.addr %s263, 2
        %s265 = smul.addr %s264, 4
        %s266 = scalar_lea.vmem %s2, %s265
        %p267 = pneg %p82
        %p268 = pneg %p79
        %p269 = pneg %p103
        %p270 = pneg %p100
        %p271 = pneg %p124
        %p272 = pneg %p121
        %p273 = pneg %p145
        %p274 = pneg %p142
        %p275 = pneg %p166
        %p276 = pneg %p163
        %p277 = pneg %p192
        %p278 = pneg %p189
        %p279 = scmp.lt.s32.totalorder %s19, 3
        %s280 = scalar_select %p279, %s19, 3
        %s281 = smul.addr %s280, 8
        %s282 = scalar_lea.vmem %s7, %s281
        %p283 = scmp.lt.s32.totalorder %s19, 3
        %s284 = scalar_select %p283, %s19, 3
        %s285 = smul.addr %s284, 2
        %s286 = smul.addr %s285, 4
        %s287 = scalar_lea.vmem %s2, %s286
        %p288 = scmp.lt.s32.totalorder %s19, 3
        %s289 = scalar_select %p288, %s19, 3
        %s290 = smul.addr %s289, 8
        %s291 = scalar_lea.vmem %s7, %s290
        %v293 = vld [vmem:[%s0] sm:$0xf]
        %v294 = vld [vmem:[%s0 + $0x4] sm:$0xf]
        %v295 = vld [vmem:[%s1] sm:$0xf]
        %v296 = vld [vmem:[%s287] sm:$0xf]
        %v297 = vld [vmem:[%s287 + $0x4] sm:$0xf]
        %v298 = vld [vmem:[#allocation2] sm:$0xf]
        %v299 = vld [vmem:[#allocation2 + $0x4] sm:$0xf]
        %v300 = vld [vmem:[#allocation2 + $0x8] sm:$0xf]
        %v301 = vld [vmem:[#allocation2 + $0xc] sm:$0xf]
        %v302 = vld [vmem:[#allocation2 + $0x10] sm:$0xf]
        %v303 = vld [vmem:[#allocation2 + $0x14] sm:$0xf]
        %v304 = vld [vmem:[#allocation2 + $0x18] sm:$0xf]
        %v305 = vld [vmem:[#allocation2 + $0x1c] sm:$0xf]
        %v306 = vld [vmem:[#allocation2 + $0x20] sm:$0xf]
        %v307 = vld [vmem:[#allocation2 + $0x24] sm:$0xf]
        %v308 = vld [vmem:[#allocation2 + $0x28] sm:$0xf]
        %v309 = vld [vmem:[#allocation2 + $0x2c] sm:$0xf]
        %v310 = vld [vmem:[#allocation2 + $0x30] sm:$0xf]
        %v311 = vld [vmem:[#allocation2 + $0x34] sm:$0xf]
        %v312 = vld [vmem:[#allocation2 + $0x38] sm:$0xf]
        %v313 = vld [vmem:[#allocation2 + $0x3c] sm:$0xf]
        %v314 = vld [vmem:[#allocation2 + $0x40] sm:$0xf]
        %v315 = vld [vmem:[#allocation2 + $0x44] sm:$0xf]
        %v316 = vld [vmem:[#allocation2 + $0x48] sm:$0xf]
        %v317 = vld [vmem:[#allocation2 + $0x4c] sm:$0xf]
        %v318 = vld [vmem:[#allocation2 + $0x50] sm:$0xf]
        %v319 = vld [vmem:[#allocation2 + $0x54] sm:$0xf]
        %v320 = vld [vmem:[#allocation2 + $0x58] sm:$0xf]
        %v321 = vld [vmem:[#allocation2 + $0x5c] sm:$0xf]
        %v322 = vld [vmem:[#allocation2 + $0x60] sm:$0xf]
        %v323 = vld [vmem:[#allocation2 + $0x64] sm:$0xf]
        %v324 = vld [vmem:[#allocation2 + $0x68] sm:$0xf]
        %v325 = vld [vmem:[#allocation2 + $0x6c] sm:$0xf]
        %v326 = vld [vmem:[#allocation2 + $0x70] sm:$0xf]
        %v327 = vld [vmem:[#allocation2 + $0x74] sm:$0xf]
        %v328 = vld [vmem:[#allocation2 + $0x78] sm:$0xf]
        %v329 = vld [vmem:[#allocation2 + $0x7c] sm:$0xf]
        %v332 = vunpack.c.l.b16 %v293
        %v333 = vunpack.c.l.b16 %v294
        %v334 = vpack.c.b16 %v333, %v332
        %v337 = vunpack.c.l.b16 %v296
        %v338 = vunpack.c.l.b16 %v297
        %v339 = vpack.c.b16 %v338, %v337
        %vm341 = vcmask 130048
        %v343 = vsel %vm341, %v334, 0
        %345 = vmatprep.subr.bf16.mxu0 0
        %346 = vmatpush1.bf16.msra.mxu0 0
        %347 = vmatprep.subr.bf16.mxu0 0
        %348 = vmatpush1.bf16.msra.mxu0 0
        %349 = vmatprep.subr.bf16.mxu0 0
        %350 = vmatpush1.bf16.msra.mxu0 0
        %351 = vmatprep.subr.bf16.mxu0 0
        %352 = vmatpush1.bf16.msra.mxu0 0
        %353 = vmatprep.subr.bf16.mxu0 0
        %354 = vmatpush1.bf16.msra.mxu0 0
        %355 = vmatprep.subr.bf16.mxu0 0
        %356 = vmatpush1.bf16.msra.mxu0 0
        %357 = vmatprep.subr.bf16.mxu0 0
        %358 = vmatpush1.bf16.msra.mxu0 0
        %359 = vmatprep.subr.bf16.mxu0 0
        %360 = vmatpush1.bf16.msra.mxu0 %v339
        %361 = vmatprep.subr.bf16.mxu0 0
        %362 = vmatpush2.bf16.msra.mxu0 0
        %363 = vmatprep.subr.bf16.mxu0 0
        %364 = vmatpush2.bf16.msra.mxu0 0
        %365 = vmatprep.subr.bf16.mxu0 0
        %366 = vmatpush2.bf16.msra.mxu0 0
        %367 = vmatprep.subr.bf16.mxu0 0
        %368 = vmatpush2.bf16.msra.mxu0 0
        %369 = vmatprep.subr.bf16.mxu0 0
        %370 = vmatpush2.bf16.msra.mxu0 0
        %371 = vmatprep.subr.bf16.mxu0 0
        %372 = vmatpush2.bf16.msra.mxu0 0
        %373 = vmatprep.subr.bf16.mxu0 0
        %374 = vmatpush2.bf16.msra.mxu0 0
        %375 = vmatprep.subr.bf16.mxu0 0
        %376 = vmatpush2.bf16.msra.mxu0 0
        %377 = vmatprep.mubr.bf16.mxu0 0
        %378 = vmatmul.mubr.bf16.gmra.mxu0 %v343
        %v379 = vpop.f32.mrf.mxu0
        %v380 = vadd.f32 0.0, %v379
        %v381 = vpop.f32.mrf.mxu0
        %v382 = vpop.f32.mrf.mxu0
        %v383 = vadd.f32 0.0, %v382
        %v384 = vpop.f32.mrf.mxu0
        %385 = vdwg.mxu0
        %v386 = vpack.c.bf16 %v383, %v380
        %v387 = vld [vmem:[%s3] sm:$0xf]
        %v388 = vld [vmem:[%s6] sm:$0x1]
        %v389 = vlaneseq
        %v390 = vshrl.u32 %v389, 7
        %v391 = vsub.s32 0, %v390
        %v392 = vrot.slane %v388, %v391
        %vm393 = vcmask 64512
        %v395 = vsel %vm393, %v386, 0
        %vm397 = vcmask 1043456
        %v399 = vsel %vm397, %v387, 0
        %401 = vmatprep.subr.bf16.mxu0 0
        %402 = vmatpush1.bf16.msra.mxu0 0
        %403 = vmatprep.subr.bf16.mxu0 0
        %404 = vmatpush1.bf16.msra.mxu0 0
        %405 = vmatprep.subr.bf16.mxu0 0
        %406 = vmatpush1.bf16.msra.mxu0 0
        %407 = vmatprep.subr.bf16.mxu0 0
        %408 = vmatpush1.bf16.msra.mxu0 0
        %409 = vmatprep.subr.bf16.mxu0 0
        %410 = vmatpush1.bf16.msra.mxu0 0
        %411 = vmatprep.subr.bf16.mxu0 0
        %412 = vmatpush1.bf16.msra.mxu0 0
        %413 = vmatprep.subr.bf16.mxu0 0
        %414 = vmatpush1.bf16.msra.mxu0 0
        %415 = vmatprep.subr.bf16.mxu0 0
        %416 = vmatpush1.bf16.msra.mxu0 %v399
        %417 = vmatprep.subr.bf16.mxu0 0
        %418 = vmatpush2.bf16.msra.mxu0 0
        %419 = vmatprep.subr.bf16.mxu0 0
        %420 = vmatpush2.bf16.msra.mxu0 0
        %421 = vmatprep.subr.bf16.mxu0 0
        %422 = vmatpush2.bf16.msra.mxu0 0
        %423 = vmatprep.subr.bf16.mxu0 0
        %424 = vmatpush2.bf16.msra.mxu0 0
        %425 = vmatprep.subr.bf16.mxu0 0
        %426 = vmatpush2.bf16.msra.mxu0 0
        %427 = vmatprep.subr.bf16.mxu0 0
        %428 = vmatpush2.bf16.msra.mxu0 0
        %429 = vmatprep.subr.bf16.mxu0 0
        %430 = vmatpush2.bf16.msra.mxu0 0
        %431 = vmatprep.subr.bf16.mxu0 0
        %432 = vmatpush2.bf16.msra.mxu0 0
        %433 = vmatprep.mubr.bf16.mxu0 0
        %434 = vmatmul.mubr.bf16.gmra.mxu0 %v395
        %v435 = vpop.f32.mrf.mxu0
        %v436 = vadd.f32 %v392, %v435
        %v437 = vpop.f32.mrf.mxu0
        %v438 = vpop.f32.mrf.mxu0
        %v439 = vadd.f32 %v392, %v438
        %v440 = vpop.f32.mrf.mxu0
        %441 = vdwg.mxu0
        %v442 = vmax.f32 %v436, 0.0
        %v443 = vmax.f32 %v439, 0.0
        %v444 = vpack.c.bf16 %v443, %v442
        %v461 = vunpack.c.l.b16 %v298
        %v462 = vunpack.c.l.b16 %v299
        %v463 = vunpack.c.l.b16 %v300
        %v464 = vunpack.c.l.b16 %v301
        %v465 = vunpack.c.l.b16 %v302
        %v466 = vunpack.c.l.b16 %v303
        %v467 = vunpack.c.l.b16 %v304
        %v468 = vunpack.c.l.b16 %v305
        %v469 = vunpack.c.l.b16 %v306
        %v470 = vunpack.c.l.b16 %v307
        %v471 = vunpack.c.l.b16 %v308
        %v472 = vunpack.c.l.b16 %v309
        %v473 = vunpack.c.l.b16 %v310
        %v474 = vunpack.c.l.b16 %v311
        %v475 = vunpack.c.l.b16 %v312
        %v476 = vunpack.c.l.b16 %v313
        %v477 = vpack.c.b16 %v462, %v461
        %v478 = vpack.c.b16 %v464, %v463
        %v479 = vpack.c.b16 %v466, %v465
        %v480 = vpack.c.b16 %v468, %v467
        %v481 = vpack.c.b16 %v470, %v469
        %v482 = vpack.c.b16 %v472, %v471
        %v483 = vpack.c.b16 %v474, %v473
        %v484 = vpack.c.b16 %v476, %v475
        %493 = vmatprep.subr.bf16.mxu0 0
        %494 = vmatpush1.bf16.msra.mxu0 %v484
        %495 = vmatprep.subr.bf16.mxu0 0
        %496 = vmatpush1.bf16.msra.mxu0 %v483
        %497 = vmatprep.subr.bf16.mxu0 0
        %498 = vmatpush1.bf16.msra.mxu0 %v482
        %499 = vmatprep.subr.bf16.mxu0 0
        %500 = vmatpush1.bf16.msra.mxu0 %v481
        %501 = vmatprep.subr.bf16.mxu0 0
        %502 = vmatpush1.bf16.msra.mxu0 %v480
        %503 = vmatprep.subr.bf16.mxu0 0
        %504 = vmatpush1.bf16.msra.mxu0 %v479
        %505 = vmatprep.subr.bf16.mxu0 0
        %506 = vmatpush1.bf16.msra.mxu0 %v478
        %507 = vmatprep.subr.bf16.mxu0 0
        %508 = vmatpush1.bf16.msra.mxu0 %v477
        %509 = vmatprep.subr.bf16.mxu0 0
        %510 = vmatpush2.bf16.msra.mxu0 0
        %511 = vmatprep.subr.bf16.mxu0 0
        %512 = vmatpush2.bf16.msra.mxu0 0
        %513 = vmatprep.subr.bf16.mxu0 0
        %514 = vmatpush2.bf16.msra.mxu0 0
        %515 = vmatprep.subr.bf16.mxu0 0
        %516 = vmatpush2.bf16.msra.mxu0 0
        %517 = vmatprep.subr.bf16.mxu0 0
        %518 = vmatpush2.bf16.msra.mxu0 0
        %519 = vmatprep.subr.bf16.mxu0 0
        %520 = vmatpush2.bf16.msra.mxu0 0
        %521 = vmatprep.subr.bf16.mxu0 0
        %522 = vmatpush2.bf16.msra.mxu0 0
        %523 = vmatprep.subr.bf16.mxu0 0
        %524 = vmatpush2.bf16.msra.mxu0 0
        %525 = vmatprep.mubr.bf16.mxu0 0
        %526 = vmatmul.mubr.bf16.gmra.mxu0 %v444
        %v527 = vpop.f32.mrf.mxu0
        %v528 = vadd.f32 0.0, %v527
        %v529 = vpop.f32.mrf.mxu0
        %v530 = vpop.f32.mrf.mxu0
        %v531 = vadd.f32 0.0, %v530
        %v532 = vpop.f32.mrf.mxu0
        %533 = vdwg.mxu0
        %v534 = vpack.c.bf16 %v531, %v528
        %v535 = vld [vmem:[%s6 + $0x1] sm:$0x1]
        %v536 = vlaneseq
        %v537 = vshrl.u32 %v536, 7
        %v538 = vsub.s32 0, %v537
        %v539 = vrot.slane %v535, %v538
        %540 = vmatprep.subr.bf16.mxu0 0
        %541 = vmatpush1.bf16.msra.mxu0 0
        %542 = vmatprep.subr.bf16.mxu0 0
        %543 = vmatpush1.bf16.msra.mxu0 0
        %544 = vmatprep.subr.bf16.mxu0 0
        %545 = vmatpush1.bf16.msra.mxu0 0
        %546 = vmatprep.subr.bf16.mxu0 0
        %547 = vmatpush1.bf16.msra.mxu0 0
        %548 = vmatprep.subr.bf16.mxu0 0
        %549 = vmatpush1.bf16.msra.mxu0 0
        %550 = vmatprep.subr.bf16.mxu0 0
        %551 = vmatpush1.bf16.msra.mxu0 0
        %552 = vmatprep.subr.bf16.mxu0 0
        %553 = vmatpush1.bf16.msra.mxu0 0
        %554 = vmatprep.subr.bf16.mxu0 0
        %555 = vmatpush1.bf16.msra.mxu0 %v534
        %556 = vmatprep.subr.bf16.mxu0 0
        %557 = vmatpush2.bf16.msra.mxu0 0
        %558 = vmatprep.subr.bf16.mxu0 0
        %559 = vmatpush2.bf16.msra.mxu0 0
        %560 = vmatprep.subr.bf16.mxu0 0
        %561 = vmatpush2.bf16.msra.mxu0 0
        %562 = vmatprep.subr.bf16.mxu0 0
        %563 = vmatpush2.bf16.msra.mxu0 0
        %564 = vmatprep.subr.bf16.mxu0 0
        %565 = vmatpush2.bf16.msra.mxu0 0
        %566 = vmatprep.subr.bf16.mxu0 0
        %567 = vmatpush2.bf16.msra.mxu0 0
        %568 = vmatprep.subr.bf16.mxu0 0
        %569 = vmatpush2.bf16.msra.mxu0 0
        %570 = vmatprep.subr.bf16.mxu0 0
        %571 = vmatpush2.bf16.msra.mxu0 0
        %572 = vmatprep.mubr.bf16.mxu0 0
        %573 = vmatmul.mubr.bf16.gmra.mxu0 %v343
        %v574 = vpop.f32.mrf.mxu0
        %v575 = vadd.f32 %v539, %v574
        %v576 = vpop.f32.mrf.mxu0
        %v577 = vpop.f32.mrf.mxu0
        %v578 = vadd.f32 %v539, %v577
        %v579 = vpop.f32.mrf.mxu0
        %580 = vdwg.mxu0
        %v581 = vmax.f32 %v575, 0.0
        %v582 = vmax.f32 %v578, 0.0
        %v583 = vpack.c.bf16 %v582, %v581
        %v585 = vsel %vm341, %v295, 0
        %587 = vmatprep.subr.bf16.mxu0 0
        %588 = vmatpush1.bf16.msra.mxu0 0
        %589 = vmatprep.subr.bf16.mxu0 0
        %590 = vmatpush1.bf16.msra.mxu0 0
        %591 = vmatprep.subr.bf16.mxu0 0
        %592 = vmatpush1.bf16.msra.mxu0 0
        %593 = vmatprep.subr.bf16.mxu0 0
        %594 = vmatpush1.bf16.msra.mxu0 0
        %595 = vmatprep.subr.bf16.mxu0 0
        %596 = vmatpush1.bf16.msra.mxu0 0
        %597 = vmatprep.subr.bf16.mxu0 0
        %598 = vmatpush1.bf16.msra.mxu0 0
        %599 = vmatprep.subr.bf16.mxu0 0
        %600 = vmatpush1.bf16.msra.mxu0 0
        %601 = vmatprep.subr.bf16.mxu0 0
        %602 = vmatpush1.bf16.msra.mxu0 %v583
        %603 = vmatprep.subr.bf16.mxu0 0
        %604 = vmatpush2.bf16.msra.mxu0 0
        %605 = vmatprep.subr.bf16.mxu0 0
        %606 = vmatpush2.bf16.msra.mxu0 0
        %607 = vmatprep.subr.bf16.mxu0 0
        %608 = vmatpush2.bf16.msra.mxu0 0
        %609 = vmatprep.subr.bf16.mxu0 0
        %610 = vmatpush2.bf16.msra.mxu0 0
        %611 = vmatprep.subr.bf16.mxu0 0
        %612 = vmatpush2.bf16.msra.mxu0 0
        %613 = vmatprep.subr.bf16.mxu0 0
        %614 = vmatpush2.bf16.msra.mxu0 0
        %615 = vmatprep.subr.bf16.mxu0 0
        %616 = vmatpush2.bf16.msra.mxu0 0
        %617 = vmatprep.subr.bf16.mxu0 0
        %618 = vmatpush2.bf16.msra.mxu0 0
        %619 = vmatprep.mubr.bf16.mxu0 0
        %620 = vmatmul.mubr.bf16.gmra.mxu0 %v585
        %v621 = vpop.f32.mrf.mxu0
        %v622 = vadd.f32 0.0, %v621
        %v623 = vpop.f32.mrf.mxu0
        %v624 = vpop.f32.mrf.mxu0
        %v625 = vpop.f32.mrf.mxu0
        %626 = vdwg.mxu0
        %v627 = vpack.c.bf16 %v622, %v622
        %v628 = vld [vmem:[%s6 + $0x2] sm:$0x1]
        %v629 = vlaneseq
        %v630 = vshrl.u32 %v629, 7
        %v631 = vsub.s32 0, %v630
        %v632 = vrot.slane %v628, %v631
        %v649 = vunpack.c.l.b16 %v314
        %v650 = vunpack.c.l.b16 %v315
        %v651 = vunpack.c.l.b16 %v316
        %v652 = vunpack.c.l.b16 %v317
        %v653 = vunpack.c.l.b16 %v318
        %v654 = vunpack.c.l.b16 %v319
        %v655 = vunpack.c.l.b16 %v320
        %v656 = vunpack.c.l.b16 %v321
        %v657 = vunpack.c.l.b16 %v322
        %v658 = vunpack.c.l.b16 %v323
        %v659 = vunpack.c.l.b16 %v324
        %v660 = vunpack.c.l.b16 %v325
        %v661 = vunpack.c.l.b16 %v326
        %v662 = vunpack.c.l.b16 %v327
        %v663 = vunpack.c.l.b16 %v328
        %v664 = vunpack.c.l.b16 %v329
        %v665 = vpack.c.b16 %v650, %v649
        %v666 = vpack.c.b16 %v652, %v651
        %v667 = vpack.c.b16 %v654, %v653
        %v668 = vpack.c.b16 %v656, %v655
        %v669 = vpack.c.b16 %v658, %v657
        %v670 = vpack.c.b16 %v660, %v659
        %v671 = vpack.c.b16 %v662, %v661
        %v672 = vpack.c.b16 %v664, %v663
        %681 = vmatprep.subr.bf16.mxu0 0
        %682 = vmatpush1.bf16.msra.mxu0 %v672
        %683 = vmatprep.subr.bf16.mxu0 0
        %684 = vmatpush1.bf16.msra.mxu0 %v671
        %685 = vmatprep.subr.bf16.mxu0 0
        %686 = vmatpush1.bf16.msra.mxu0 %v670
        %687 = vmatprep.subr.bf16.mxu0 0
        %688 = vmatpush1.bf16.msra.mxu0 %v669
        %689 = vmatprep.subr.bf16.mxu0 0
        %690 = vmatpush1.bf16.msra.mxu0 %v668
        %691 = vmatprep.subr.bf16.mxu0 0
        %692 = vmatpush1.bf16.msra.mxu0 %v667
        %693 = vmatprep.subr.bf16.mxu0 0
        %694 = vmatpush1.bf16.msra.mxu0 %v666
        %695 = vmatprep.subr.bf16.mxu0 0
        %696 = vmatpush1.bf16.msra.mxu0 %v665
        %697 = vmatprep.subr.bf16.mxu0 0
        %698 = vmatpush2.bf16.msra.mxu0 0
        %699 = vmatprep.subr.bf16.mxu0 0
        %700 = vmatpush2.bf16.msra.mxu0 0
        %701 = vmatprep.subr.bf16.mxu0 0
        %702 = vmatpush2.bf16.msra.mxu0 0
        %703 = vmatprep.subr.bf16.mxu0 0
        %704 = vmatpush2.bf16.msra.mxu0 0
        %705 = vmatprep.subr.bf16.mxu0 0
        %706 = vmatpush2.bf16.msra.mxu0 0
        %707 = vmatprep.subr.bf16.mxu0 0
        %708 = vmatpush2.bf16.msra.mxu0 0
        %709 = vmatprep.subr.bf16.mxu0 0
        %710 = vmatpush2.bf16.msra.mxu0 0
        %711 = vmatprep.subr.bf16.mxu0 0
        %712 = vmatpush2.bf16.msra.mxu0 0
        %713 = vmatprep.mubr.bf16.mxu0 0
        %714 = vmatmul.mubr.bf16.gmra.mxu0 %v627
        %v715 = vpop.f32.mrf.mxu0
        %v716 = vadd.f32 %v632, %v715
        %v717 = vpop.f32.mrf.mxu0
        %v718 = vpop.f32.mrf.mxu0
        %v719 = vpop.f32.mrf.mxu0
        %720 = vdwg.mxu0
        %v721 = vmax.f32 %v716, 0.0
        %v722 = vpack.c.bf16 %v721, %v721
        %v723 = vld [vmem:[%s5] sm:$0xf]
        %v724 = vld [vmem:[%s5 + $0x4] sm:$0xf]
        %v725 = vld [vmem:[%s5 + $0x8] sm:$0xf]
        %v726 = vld [vmem:[%s5 + $0xc] sm:$0xf]
        %v727 = vld [vmem:[%s5 + $0x10] sm:$0xf]
        %v728 = vld [vmem:[%s5 + $0x14] sm:$0xf]
        %v729 = vld [vmem:[%s5 + $0x18] sm:$0xf]
        %v730 = vld [vmem:[%s5 + $0x1c] sm:$0xf]
        %v731 = vld [vmem:[%s5 + $0x20] sm:$0xf]
        %v732 = vld [vmem:[%s5 + $0x24] sm:$0xf]
        %v733 = vld [vmem:[%s5 + $0x28] sm:$0xf]
        %v734 = vld [vmem:[%s5 + $0x2c] sm:$0xf]
        %v735 = vld [vmem:[%s5 + $0x30] sm:$0xf]
        %v736 = vld [vmem:[%s5 + $0x34] sm:$0xf]
        %v737 = vld [vmem:[%s5 + $0x38] sm:$0xf]
        %v738 = vld [vmem:[%s5 + $0x3c] sm:$0xf]
        %v739 = vld [vmem:[%s6 + $0x3] sm:$0x1]
        %v740 = vlaneseq
        %v741 = vshrl.u32 %v740, 7
        %v742 = vsub.s32 0, %v741
        %v743 = vrot.slane %v739, %v742
        %v760 = vunpack.c.l.b16 %v723
        %v761 = vunpack.c.l.b16 %v724
        %v762 = vunpack.c.l.b16 %v725
        %v763 = vunpack.c.l.b16 %v726
        %v764 = vunpack.c.l.b16 %v727
        %v765 = vunpack.c.l.b16 %v728
        %v766 = vunpack.c.l.b16 %v729
        %v767 = vunpack.c.l.b16 %v730
        %v768 = vunpack.c.l.b16 %v731
        %v769 = vunpack.c.l.b16 %v732
        %v770 = vunpack.c.l.b16 %v733
        %v771 = vunpack.c.l.b16 %v734
        %v772 = vunpack.c.l.b16 %v735
        %v773 = vunpack.c.l.b16 %v736
        %v774 = vunpack.c.l.b16 %v737
        %v775 = vunpack.c.l.b16 %v738
        %v776 = vpack.c.b16 %v761, %v760
        %v777 = vpack.c.b16 %v763, %v762
        %v778 = vpack.c.b16 %v765, %v764
        %v779 = vpack.c.b16 %v767, %v766
        %v780 = vpack.c.b16 %v769, %v768
        %v781 = vpack.c.b16 %v771, %v770
        %v782 = vpack.c.b16 %v773, %v772
        %v783 = vpack.c.b16 %v775, %v774
        %792 = vmatprep.subr.bf16.mxu0 0
        %793 = vmatpush1.bf16.msra.mxu0 %v783
        %794 = vmatprep.subr.bf16.mxu0 0
        %795 = vmatpush1.bf16.msra.mxu0 %v782
        %796 = vmatprep.subr.bf16.mxu0 0
        %797 = vmatpush1.bf16.msra.mxu0 %v781
        %798 = vmatprep.subr.bf16.mxu0 0
        %799 = vmatpush1.bf16.msra.mxu0 %v780
        %800 = vmatprep.subr.bf16.mxu0 0
        %801 = vmatpush1.bf16.msra.mxu0 %v779
        %802 = vmatprep.subr.bf16.mxu0 0
        %803 = vmatpush1.bf16.msra.mxu0 %v778
        %804 = vmatprep.subr.bf16.mxu0 0
        %805 = vmatpush1.bf16.msra.mxu0 %v777
        %806 = vmatprep.subr.bf16.mxu0 0
        %807 = vmatpush1.bf16.msra.mxu0 %v776
        %808 = vmatprep.subr.bf16.mxu0 0
        %809 = vmatpush2.bf16.msra.mxu0 0
        %810 = vmatprep.subr.bf16.mxu0 0
        %811 = vmatpush2.bf16.msra.mxu0 0
        %812 = vmatprep.subr.bf16.mxu0 0
        %813 = vmatpush2.bf16.msra.mxu0 0
        %814 = vmatprep.subr.bf16.mxu0 0
        %815 = vmatpush2.bf16.msra.mxu0 0
        %816 = vmatprep.subr.bf16.mxu0 0
        %817 = vmatpush2.bf16.msra.mxu0 0
        %818 = vmatprep.subr.bf16.mxu0 0
        %819 = vmatpush2.bf16.msra.mxu0 0
        %820 = vmatprep.subr.bf16.mxu0 0
        %821 = vmatpush2.bf16.msra.mxu0 0
        %822 = vmatprep.subr.bf16.mxu0 0
        %823 = vmatpush2.bf16.msra.mxu0 0
        %824 = vmatprep.mubr.bf16.mxu0 0
        %825 = vmatmul.mubr.bf16.gmra.mxu0 %v722
        %v826 = vpop.f32.mrf.mxu0
        %v827 = vadd.f32 %v743, %v826
        %v828 = vpop.f32.mrf.mxu0
        %v829 = vpop.f32.mrf.mxu0
        %v830 = vpop.f32.mrf.mxu0
        %831 = vdwg.mxu0
        %832 = vst [vmem:[%s291] sm:$0xff] %v827
        %p833 = scmp.lt.s32.totalorder %s19, 3
        %s834 = scalar_select %p833, %s19, 3
        %s835 = smul.addr %s834, 8
        %s836 = scalar_lea.vmem %s7, %s835
        // Predicated region
        $region53: #{qnetwork_forward.1} parent=47 // pred_check
          %p837 = pneg %p189
        $region54: #{qnetwork_forward.1} parent=47 // pred_check_branch
          %839 = sbr.rel (%p837) target = $region56
        $region55: #{qnetwork_forward.1} parent=47 // pred_region
          _
        $region56: #{qnetwork_forward.1} parent=47 // pred_fallthru
          _
      $region48: #{qnetwork_forward.1} parent=5 // pred_fallthru
        _
      %p840 = scmp.le.s32.totalorder 2, %s14
      // Predicated region
      $region57: #{qnetwork_forward.1} parent=5 // pred_check
        %p841 = pneg %p840
      $region58: #{qnetwork_forward.1} parent=5 // pred_check_branch
        %843 = sbr.rel (%p841) target = $region60
      $region59: #{qnetwork_forward.1} parent=5 // pred_region
        %s844 = ssub.s32 %s14, 2
        // Predicated region
        $region61: #{qnetwork_forward.1} parent=59 // pred_check
          %p845 = pneg %p195
        $region62: #{qnetwork_forward.1} parent=59 // pred_check_branch
          %847 = sbr.rel (%p845) target = $region64
        $region63: #{qnetwork_forward.1} parent=59 // pred_region
          %p848 = scmp.lt.s32.totalorder %s20, 3
          %s849 = scalar_select %p848, %s20, 3
          %s850 = smul.addr %s849, 8
          %s851 = scalar_lea.vmem %s7, %s850
        $region64: #{qnetwork_forward.1} parent=59 // pred_fallthru
          _
      $region60: #{qnetwork_forward.1} parent=5 // pred_fallthru
        _
    $region6: #{qnetwork_forward.1} parent=1 // loop_footer
      %s18 = sadd.s32 1, %s14
    $region7: #{qnetwork_forward.1} parent=1 // loop_footer_branch
      %13 = sbr.rel target = $region3
    $region8: #{qnetwork_forward.1} parent=1 // loop_exit
      _
    %852 = vsyncpa [#allocation3], 1
    %s853 = scalar_lea.sflag [#allocation3], 1
    %854 = vsyncpa %s853, 1

</llo_original>
